<compile_context>
chip_gen: v7x
topology: tpu7x:2x2x1
jax: 0.10.0
libtpu: 0.0.40
codegen_flags: <defaults>
</compile_context>

<pallas_src>
import jax
import jax.numpy as jnp
from jax.experimental import pallas as pl
from jax.experimental.pallas import tpu as pltpu

_LANE = 128      # lane width (last dim)
_SUBLANE = 8     # f32 sublane height (second-to-last dim)


def _round_up(x, m):
    return ((x + m - 1) // m) * m


def value_model_kernel(x_ref,
                       w1_ref, b1_ref,
                       w2_ref, b2_ref,
                       w3_ref, b3_ref,
                       w4_ref, b4_ref,
                       o_ref):
    # Layer 1: Linear + ReLU (f32 accumulation on the MXU, f32 bias add on the VPU).
    h = jnp.dot(x_ref[...], w1_ref[...], preferred_element_type=jnp.float32)
    h = jnp.maximum(h + b1_ref[...], 0.0)
    # Layer 2: Linear + ReLU.
    h = jnp.dot(h.astype(w2_ref.dtype), w2_ref[...], preferred_element_type=jnp.float32)
    h = jnp.maximum(h + b2_ref[...], 0.0)
    # Layer 3: Linear + ReLU.
    h = jnp.dot(h.astype(w3_ref.dtype), w3_ref[...], preferred_element_type=jnp.float32)
    h = jnp.maximum(h + b3_ref[...], 0.0)
    # Final layer: Linear, no activation. Output block is lane-dense (TB, 128);
    # only column 0 is meaningful (w4/b4 are zero-padded past the true output width).
    out = jnp.dot(h.astype(w4_ref.dtype), w4_ref[...], preferred_element_type=jnp.float32)
    o_ref[...] = (out + b4_ref[...]).astype(o_ref.dtype)


def value_model_forward(x, params, *, block_batch=512):
    """x: [B, input_size]. params: dict of w{i}: [in, out], b{i}: [1, out] (b in f32)."""
    B, in_size = x.shape
    h1 = params["w1"].shape[1]
    h3 = params["w4"].shape[0]
    out_size = params["w4"].shape[1]
    w_dtype = params["w1"].dtype

    # Padded feature / output widths (done once at trace time, in the wrapper).
    in_pad = _round_up(max(in_size, _SUBLANE), _SUBLANE)   # 6 -> 8
    out_pad = _LANE                                        # 1 -> 128 (lane-dense stores)

    # Batch tile: multiple of 8, capped by block_batch (sized for v7x 64 MiB VMEM).
    tb = min(_round_up(block_batch, _SUBLANE), _round_up(B, _SUBLANE))
    b_pad = _round_up(B, tb)

    x_p = jnp.zeros((b_pad, in_pad), w_dtype).at[:B, :in_size].set(x.astype(w_dtype))
    w1_p = jnp.zeros((in_pad, h1), w_dtype).at[:in_size, :].set(params["w1"])
    w4_p = jnp.zeros((h3, out_pad), w_dtype).at[:, :out_size].set(params["w4"])
    b4_p = jnp.zeros((1, out_pad), params["b4"].dtype).at[:, :out_size].set(params["b4"])

    args = (x_p,
            w1_p, params["b1"],
            params["w2"], params["b2"],
            params["w3"], params["b3"],
            w4_p, b4_p)

    # x/out stream over the batch grid; weights & biases stay VMEM-resident
    # (constant index_map -> no re-DMA across grid steps).
    resident = lambda a: pl.BlockSpec(a.shape, lambda i: (0, 0))
    in_specs = [pl.BlockSpec((tb, in_pad), lambda i: (i, 0))]
    in_specs += [resident(a) for a in args[1:]]

    out_p = pl.pallas_call(
        value_model_kernel,
        out_shape=jax.ShapeDtypeStruct((b_pad, out_pad), jnp.float32),
        grid=(b_pad // tb,),
        in_specs=in_specs,
        out_specs=pl.BlockSpec((tb, out_pad), lambda i: (i, 0)),
        compiler_params=pltpu.CompilerParams(
            dimension_semantics=("parallel",),          # megacore sharding on v7x
            vmem_limit_bytes=64 * 1024 * 1024,
        ),
    )(*args)

    return out_p[:B, :out_size]


def init_params(key, input_size, h1, h2, h3, output_size, param_dtype=jnp.float32):
    """PyTorch-style uniform init. Weights stored [in, out]; biases kept f32."""
    dims = [(input_size, h1), (h1, h2), (h2, h3), (h3, output_size)]
    params = {}
    for i, (fan_in, fan_out) in enumerate(dims, start=1):
        key, kw, kb = jax.random.split(key, 3)
        bound = 1.0 / jnp.sqrt(fan_in)
        params[f"w{i}"] = jax.random.uniform(
            kw, (fan_in, fan_out), jnp.float32, -bound, bound).astype(param_dtype)
        params[f"b{i}"] = jax.random.uniform(
            kb, (1, fan_out), jnp.float32, -bound, bound)
    return params


def reference_forward(x, params):
    f32 = lambda a: a.astype(jnp.float32)
    h = jnp.maximum(f32(x) @ f32(params["w1"]) + params["b1"], 0.0)
    h = jnp.maximum(h @ f32(params["w2"]) + params["b2"], 0.0)
    h = jnp.maximum(h @ f32(params["w3"]) + params["b3"], 0.0)
    return h @ f32(params["w4"]) + params["b4"]


if __name__ == "__main__":
    # Acrobot-style value network: 6-dim observation -> scalar value.
    input_size, output_size = 6, 1
    hidden_one, hidden_two, hidden_three = 32, 32, 32

    key = jax.random.PRNGKey(0)
    key, kx1, kx2 = jax.random.split(key, 3)
    params = init_params(key, input_size, hidden_one, hidden_two,
                         hidden_three, output_size)

    # Small single-tile case (B=8).
    x_small = jax.random.normal(kx1, (8, input_size), jnp.float32)
    out_small = jax.block_until_ready(value_model_forward(x_small, params))
    ref_small = reference_forward(x_small, params)
    assert out_small.shape == (8, output_size)
    assert jnp.allclose(out_small, ref_small, atol=1e-5, rtol=1e-5), "mismatch (B=8)"

    # Multi-tile case exercising the batch grid + padding (B=200, TB=64 -> grid=(4,)).
    x_big = jax.random.normal(kx2, (200, input_size), jnp.float32)
    out_big = jax.block_until_ready(value_model_forward(x_big, params, block_batch=64))
    ref_big = reference_forward(x_big, params)
    assert out_big.shape == (200, output_size)
    assert jnp.allclose(out_big, ref_big, atol=1e-5, rtol=1e-5), "mismatch (B=200)"

    print("KERNEL_OK")
</pallas_src>

<mosaic_0001>
module attributes {stable_mosaic.version = 11 : i64} {
  func.func @value_model_kernel(%arg0: i32, %arg1: memref<8x8xf32, #tpu.memory_space<vmem>>, %arg2: memref<8x32xf32, #tpu.memory_space<vmem>>, %arg3: memref<1x32xf32, #tpu.memory_space<vmem>>, %arg4: memref<32x32xf32, #tpu.memory_space<vmem>>, %arg5: memref<1x32xf32, #tpu.memory_space<vmem>>, %arg6: memref<32x32xf32, #tpu.memory_space<vmem>>, %arg7: memref<1x32xf32, #tpu.memory_space<vmem>>, %arg8: memref<32x128xf32, #tpu.memory_space<vmem>>, %arg9: memref<1x128xf32, #tpu.memory_space<vmem>>, %arg10: memref<8x128xf32, #tpu.memory_space<vmem>>) attributes {dimension_semantics = [#tpu.dimension_semantics<parallel>], iteration_bounds = array<i64: 1>, scalar_prefetch = 0 : i64, scratch_operands = 0 : i64, tpu.core_type = #tpu.core_type<tc>, window_params = [{transform_indices = @transform_0, window_bounds = array<i64: 8, 8>}, {pipeline_mode = #tpu.pipeline_mode<synchronous>, transform_indices = @transform_1, window_bounds = array<i64: 8, 32>}, {pipeline_mode = #tpu.pipeline_mode<synchronous>, transform_indices = @transform_2, window_bounds = array<i64: 1, 32>}, {pipeline_mode = #tpu.pipeline_mode<synchronous>, transform_indices = @transform_3, window_bounds = array<i64: 32, 32>}, {pipeline_mode = #tpu.pipeline_mode<synchronous>, transform_indices = @transform_4, window_bounds = array<i64: 1, 32>}, {pipeline_mode = #tpu.pipeline_mode<synchronous>, transform_indices = @transform_5, window_bounds = array<i64: 32, 32>}, {pipeline_mode = #tpu.pipeline_mode<synchronous>, transform_indices = @transform_6, window_bounds = array<i64: 1, 32>}, {pipeline_mode = #tpu.pipeline_mode<synchronous>, transform_indices = @transform_7, window_bounds = array<i64: 32, 128>}, {pipeline_mode = #tpu.pipeline_mode<synchronous>, transform_indices = @transform_8, window_bounds = array<i64: 1, 128>}, {transform_indices = @transform_9, window_bounds = array<i64: 8, 128>}]} {
    %c0 = arith.constant 0 : index
    %c0_0 = arith.constant 0 : index
    %0 = vector.load %arg1[%c0, %c0_0] : memref<8x8xf32, #tpu.memory_space<vmem>>, vector<8x8xf32>
    %c0_1 = arith.constant 0 : index
    %c0_2 = arith.constant 0 : index
    %1 = vector.load %arg2[%c0_1, %c0_2] : memref<8x32xf32, #tpu.memory_space<vmem>>, vector<8x32xf32>
    %cst = arith.constant dense<0.000000e+00> : vector<8x32xf32>
    %2 = tpu.matmul %0, %1, %cst {dimension_numbers = #tpu.dot_dimension_numbers<[1], [0], [0], [1], [0, 0, 1, 1], [], []>} : vector<8x8xf32>, vector<8x32xf32>, vector<8x32xf32> -> vector<8x32xf32>
    %c0_3 = arith.constant 0 : index
    %c0_4 = arith.constant 0 : index
    %3 = vector.load %arg3[%c0_3, %c0_4] : memref<1x32xf32, #tpu.memory_space<vmem>>, vector<1x32xf32>
    %4 = vector.broadcast %3 : vector<1x32xf32> to vector<8x32xf32>
    %5 = arith.addf %2, %4 : vector<8x32xf32>
    %cst_5 = arith.constant 0.000000e+00 : f32
    %6 = vector.broadcast %cst_5 : f32 to vector<8x32xf32>
    %7 = arith.maximumf %5, %6 : vector<8x32xf32>
    %c0_6 = arith.constant 0 : index
    %c0_7 = arith.constant 0 : index
    %8 = vector.load %arg4[%c0_6, %c0_7] : memref<32x32xf32, #tpu.memory_space<vmem>>, vector<32x32xf32>
    %cst_8 = arith.constant dense<0.000000e+00> : vector<8x32xf32>
    %9 = tpu.matmul %7, %8, %cst_8 {dimension_numbers = #tpu.dot_dimension_numbers<[1], [0], [0], [1], [0, 0, 1, 1], [], []>} : vector<8x32xf32>, vector<32x32xf32>, vector<8x32xf32> -> vector<8x32xf32>
    %c0_9 = arith.constant 0 : index
    %c0_10 = arith.constant 0 : index
    %10 = vector.load %arg5[%c0_9, %c0_10] : memref<1x32xf32, #tpu.memory_space<vmem>>, vector<1x32xf32>
    %11 = vector.broadcast %10 : vector<1x32xf32> to vector<8x32xf32>
    %12 = arith.addf %9, %11 : vector<8x32xf32>
    %cst_11 = arith.constant 0.000000e+00 : f32
    %13 = vector.broadcast %cst_11 : f32 to vector<8x32xf32>
    %14 = arith.maximumf %12, %13 : vector<8x32xf32>
    %c0_12 = arith.constant 0 : index
    %c0_13 = arith.constant 0 : index
    %15 = vector.load %arg6[%c0_12, %c0_13] : memref<32x32xf32, #tpu.memory_space<vmem>>, vector<32x32xf32>
    %cst_14 = arith.constant dense<0.000000e+00> : vector<8x32xf32>
    %16 = tpu.matmul %14, %15, %cst_14 {dimension_numbers = #tpu.dot_dimension_numbers<[1], [0], [0], [1], [0, 0, 1, 1], [], []>} : vector<8x32xf32>, vector<32x32xf32>, vector<8x32xf32> -> vector<8x32xf32>
    %c0_15 = arith.constant 0 : index
    %c0_16 = arith.constant 0 : index
    %17 = vector.load %arg7[%c0_15, %c0_16] : memref<1x32xf32, #tpu.memory_space<vmem>>, vector<1x32xf32>
    %18 = vector.broadcast %17 : vector<1x32xf32> to vector<8x32xf32>
    %19 = arith.addf %16, %18 : vector<8x32xf32>
    %cst_17 = arith.constant 0.000000e+00 : f32
    %20 = vector.broadcast %cst_17 : f32 to vector<8x32xf32>
    %21 = arith.maximumf %19, %20 : vector<8x32xf32>
    %c0_18 = arith.constant 0 : index
    %c0_19 = arith.constant 0 : index
    %22 = vector.load %arg8[%c0_18, %c0_19] : memref<32x128xf32, #tpu.memory_space<vmem>>, vector<32x128xf32>
    %cst_20 = arith.constant dense<0.000000e+00> : vector<8x128xf32>
    %23 = tpu.matmul %21, %22, %cst_20 {dimension_numbers = #tpu.dot_dimension_numbers<[1], [0], [0], [1], [0, 0, 1, 1], [], []>} : vector<8x32xf32>, vector<32x128xf32>, vector<8x128xf32> -> vector<8x128xf32>
    %c0_21 = arith.constant 0 : index
    %c0_22 = arith.constant 0 : index
    %24 = vector.load %arg9[%c0_21, %c0_22] : memref<1x128xf32, #tpu.memory_space<vmem>>, vector<1x128xf32>
    %25 = vector.broadcast %24 : vector<1x128xf32> to vector<8x128xf32>
    %26 = arith.addf %23, %25 : vector<8x128xf32>
    %c0_23 = arith.constant 0 : index
    %c0_24 = arith.constant 0 : index
    %27 = vector.load %arg10[%c0_23, %c0_24] : memref<8x128xf32, #tpu.memory_space<vmem>>, vector<8x128xf32>
    tpu.vector_store %arg10[%c0_23, %c0_24], %26 {strides = array<i32>} : memref<8x128xf32, #tpu.memory_space<vmem>>, vector<8x128xf32>,
    return
  }
  func.func @transform_0(%arg0: i32) -> (i32, i32) {
    %c0_i32 = arith.constant 0 : i32
    %c0_i32_0 = arith.constant 0 : i32
    return %arg0, %c0_i32 : i32, i32
  }
  func.func @transform_1(%arg0: i32) -> (i32, i32) {
    %c0_i32 = arith.constant 0 : i32
    %c0_i32_0 = arith.constant 0 : i32
    %c0_i32_1 = arith.constant 0 : i32
    return %c0_i32, %c0_i32_0 : i32, i32
  }
  func.func @transform_2(%arg0: i32) -> (i32, i32) {
    %c0_i32 = arith.constant 0 : i32
    %c0_i32_0 = arith.constant 0 : i32
    %c0_i32_1 = arith.constant 0 : i32
    return %c0_i32, %c0_i32_0 : i32, i32
  }
  func.func @transform_3(%arg0: i32) -> (i32, i32) {
    %c0_i32 = arith.constant 0 : i32
    %c0_i32_0 = arith.constant 0 : i32
    %c0_i32_1 = arith.constant 0 : i32
    return %c0_i32, %c0_i32_0 : i32, i32
  }
  func.func @transform_4(%arg0: i32) -> (i32, i32) {
    %c0_i32 = arith.constant 0 : i32
    %c0_i32_0 = arith.constant 0 : i32
    %c0_i32_1 = arith.constant 0 : i32
    return %c0_i32, %c0_i32_0 : i32, i32
  }
  func.func @transform_5(%arg0: i32) -> (i32, i32) {
    %c0_i32 = arith.constant 0 : i32
    %c0_i32_0 = arith.constant 0 : i32
    %c0_i32_1 = arith.constant 0 : i32
    return %c0_i32, %c0_i32_0 : i32, i32
  }
  func.func @transform_6(%arg0: i32) -> (i32, i32) {
    %c0_i32 = arith.constant 0 : i32
    %c0_i32_0 = arith.constant 0 : i32
    %c0_i32_1 = arith.constant 0 : i32
    return %c0_i32, %c0_i32_0 : i32, i32
  }
  func.func @transform_7(%arg0: i32) -> (i32, i32) {
    %c0_i32 = arith.constant 0 : i32
    %c0_i32_0 = arith.constant 0 : i32
    %c0_i32_1 = arith.constant 0 : i32
    return %c0_i32, %c0_i32_0 : i32, i32
  }
  func.func @transform_8(%arg0: i32) -> (i32, i32) {
    %c0_i32 = arith.constant 0 : i32
    %c0_i32_0 = arith.constant 0 : i32
    %c0_i32_1 = arith.constant 0 : i32
    return %c0_i32, %c0_i32_0 : i32, i32
  }
  func.func @transform_9(%arg0: i32) -> (i32, i32) {
    %c0_i32 = arith.constant 0 : i32
    %c0_i32_0 = arith.constant 0 : i32
    return %arg0, %c0_i32 : i32, i32
  }
}

</mosaic_0001>

<llo_original>
// kernel: tpu_custom_call.1
$region0: #{tpu_custom_call.1}
  #allocation0 [shape = 'u32[]', space=smem, size = 0x4, offset = 0x4, fixed_abs, tag = 'smem constant byte address 0x4 - core index']
  #allocation1 [shape = 'u32[144,128]{1,0:T(1,128)}', space=vmem, size = 0x12000, scoped, tag = 'internal scratch']
  %s0 = inlined_call_operand.hbm [shape: f32[8,8], index: 0, kind: input, shape index: {}]
  %s1 = inlined_call_operand.hbm [shape: f32[8,32], index: 1, kind: input, shape index: {}]
  %s2 = inlined_call_operand.hbm [shape: f32[1,32], index: 2, kind: input, shape index: {}]
  %s3 = inlined_call_operand.hbm [shape: f32[32,32], index: 3, kind: input, shape index: {}]
  %s4 = inlined_call_operand.hbm [shape: f32[1,32], index: 4, kind: input, shape index: {}]
  %s5 = inlined_call_operand.hbm [shape: f32[32,32], index: 5, kind: input, shape index: {}]
  %s6 = inlined_call_operand.hbm [shape: f32[1,32], index: 6, kind: input, shape index: {}]
  %s7 = inlined_call_operand.hbm [shape: f32[32,128], index: 7, kind: input, shape index: {}]
  %s8 = inlined_call_operand.hbm [shape: f32[1,128], index: 8, kind: input, shape index: {}]
  %s9 = inlined_call_operand.hbm [shape: f32[8,128], index: 9, kind: output, shape index: {}]
  %s10 = sld [smem:[#allocation0]]
  $region82: #{tpu_custom_call.1} parent=0
    _
  %s12 = ssub.s32 1, %s10
  %s13 = scalar_select 0, %s12, %s10
  $region1: #{tpu_custom_call.1} parent=0
    #allocation2 [shape = 'u8[4096]{0}', space=vmem, size = 0x1000, scoped, tag = 'input window, operand 0, single buffered']
    #allocation3 [shape = 's32[1]{0}', space=sflag, size = 0x4, scoped, tag = 'scoped memory for tpu_custom_call.1']
    #allocation4 [shape = 's32[1]{0}', space=sflag, size = 0x4, scoped, tag = 'scoped memory for tpu_custom_call.1']
    #allocation5 [shape = 'u8[4096]{0}', space=vmem, size = 0x1000, scoped, tag = 'input window, operand 1, single buffered']
    #allocation6 [shape = 's32[1]{0}', space=sflag, size = 0x4, scoped, tag = 'scoped memory for tpu_custom_call.1']
    #allocation7 [shape = 'u8[512]{0}', space=vmem, size = 0x400, scoped, tag = 'input window, operand 2, single buffered']
    #allocation8 [shape = 'u8[16384]{0}', space=vmem, size = 0x4000, scoped, tag = 'input window, operand 3, single buffered']
    #allocation9 [shape = 's32[1]{0}', space=sflag, size = 0x4, scoped, tag = 'scoped memory for tpu_custom_call.1']
    #allocation10 [shape = 'u8[512]{0}', space=vmem, size = 0x400, scoped, tag = 'input window, operand 4, single buffered']
    #allocation11 [shape = 'u8[16384]{0}', space=vmem, size = 0x4000, scoped, tag = 'input window, operand 5, single buffered']
    #allocation12 [shape = 's32[1]{0}', space=sflag, size = 0x4, scoped, tag = 'scoped memory for tpu_custom_call.1']
    #allocation13 [shape = 'u8[512]{0}', space=vmem, size = 0x400, scoped, tag = 'input window, operand 6, single buffered']
    #allocation14 [shape = 'u8[16384]{0}', space=vmem, size = 0x4000, scoped, tag = 'input window, operand 7, single buffered']
    #allocation15 [shape = 's32[1]{0}', space=sflag, size = 0x4, scoped, tag = 'scoped memory for tpu_custom_call.1']
    #allocation16 [shape = 'u8[512]{0}', space=vmem, size = 0x400, scoped, tag = 'input window, operand 8, single buffered']
    #allocation17 [shape = 'u8[4096]{0}', space=vmem, size = 0x1000, scoped, tag = 'output window, operand 0, single buffered']
    %14 = vsyncpa [#allocation3], 0
    %15 = vsyncpa [#allocation6], 0
    %16 = vsyncpa [#allocation9], 0
    %17 = vsyncpa [#allocation12], 0
    %18 = vsyncpa [#allocation15], 0
    %19 = vsyncpa [#allocation4], 0
    // Predicated region
    $region2: #{tpu_custom_call.1} parent=1 // pred_check
      _
    $region3: #{tpu_custom_call.1} parent=1 // pred_check_branch
      %21 = sbr.rel (0) target = $region5
    $region4: #{tpu_custom_call.1} parent=1 // pred_region
      %s23 = ssub.s32 128, 128
      %24 = vsyncadd [#allocation3], %s23
      %s26 = sshll.u32 [#allocation2], 4
      %s27 = int_to_ptr.vmem [resolvable:$true] %s26
      %29 = dma.hbm_to_vmem [thread:$0]  %s0, 128, %s27, [#allocation3]
    $region5: #{tpu_custom_call.1} parent=1 // pred_fallthru
      _
    // Predicated region
    $region6: #{tpu_custom_call.1} parent=1 // pred_check
      _
    $region7: #{tpu_custom_call.1} parent=1 // pred_check_branch
      %31 = sbr.rel (0) target = $region9
    $region8: #{tpu_custom_call.1} parent=1 // pred_region
      %s33 = ssub.s32 128, 128
      %34 = vsyncadd [#allocation6], %s33
      %s36 = sshll.u32 [#allocation5], 4
      %s37 = int_to_ptr.vmem [resolvable:$true] %s36
      %39 = dma.hbm_to_vmem [thread:$0]  %s1, 128, %s37, [#allocation6]
    $region9: #{tpu_custom_call.1} parent=1 // pred_fallthru
      _
    // Predicated region
    $region10: #{tpu_custom_call.1} parent=1 // pred_check
      _
    $region11: #{tpu_custom_call.1} parent=1 // pred_check_branch
      %41 = sbr.rel (0) target = $region13
    $region12: #{tpu_custom_call.1} parent=1 // pred_region
      %s43 = ssub.s32 16, 16
      %44 = vsyncadd [#allocation6], %s43
      %s46 = sshll.u32 [#allocation7], 4
      %s47 = int_to_ptr.vmem [resolvable:$true] %s46
      %49 = dma.hbm_to_vmem [thread:$0]  %s2, 16, %s47, [#allocation6]
    $region13: #{tpu_custom_call.1} parent=1 // pred_fallthru
      _
    // Predicated region
    $region14: #{tpu_custom_call.1} parent=1 // pred_check
      _
    $region15: #{tpu_custom_call.1} parent=1 // pred_check_branch
      %51 = sbr.rel (0) target = $region17
    $region16: #{tpu_custom_call.1} parent=1 // pred_region
      %s53 = ssub.s32 512, 512
      %54 = vsyncadd [#allocation9], %s53
      %s55 = sshll.u32 [#allocation8], 4
      %s56 = int_to_ptr.vmem [resolvable:$true] %s55
      %61 = dma.hbm_to_vmem [thread:$0]  %s3, 512, %s56, [#allocation9], 128, 128, 8
    $region17: #{tpu_custom_call.1} parent=1 // pred_fallthru
      _
    // Predicated region
    $region18: #{tpu_custom_call.1} parent=1 // pred_check
      _
    $region19: #{tpu_custom_call.1} parent=1 // pred_check_branch
      %63 = sbr.rel (0) target = $region21
    $region20: #{tpu_custom_call.1} parent=1 // pred_region
      %s65 = ssub.s32 16, 16
      %66 = vsyncadd [#allocation9], %s65
      %s68 = sshll.u32 [#allocation10], 4
      %s69 = int_to_ptr.vmem [resolvable:$true] %s68
      %71 = dma.hbm_to_vmem [thread:$0]  %s4, 16, %s69, [#allocation9]
    $region21: #{tpu_custom_call.1} parent=1 // pred_fallthru
      _
    // Predicated region
    $region22: #{tpu_custom_call.1} parent=1 // pred_check
      _
    $region23: #{tpu_custom_call.1} parent=1 // pred_check_branch
      %73 = sbr.rel (0) target = $region25
    $region24: #{tpu_custom_call.1} parent=1 // pred_region
      %s75 = ssub.s32 512, 512
      %76 = vsyncadd [#allocation12], %s75
      %s77 = sshll.u32 [#allocation11], 4
      %s78 = int_to_ptr.vmem [resolvable:$true] %s77
      %83 = dma.hbm_to_vmem [thread:$0]  %s5, 512, %s78, [#allocation12], 128, 128, 8
    $region25: #{tpu_custom_call.1} parent=1 // pred_fallthru
      _
    // Predicated region
    $region26: #{tpu_custom_call.1} parent=1 // pred_check
      _
    $region27: #{tpu_custom_call.1} parent=1 // pred_check_branch
      %85 = sbr.rel (0) target = $region29
    $region28: #{tpu_custom_call.1} parent=1 // pred_region
      %s87 = ssub.s32 16, 16
      %88 = vsyncadd [#allocation12], %s87
      %s90 = sshll.u32 [#allocation13], 4
      %s91 = int_to_ptr.vmem [resolvable:$true] %s90
      %93 = dma.hbm_to_vmem [thread:$0]  %s6, 16, %s91, [#allocation12]
    $region29: #{tpu_custom_call.1} parent=1 // pred_fallthru
      _
    // Predicated region
    $region30: #{tpu_custom_call.1} parent=1 // pred_check
      _
    $region31: #{tpu_custom_call.1} parent=1 // pred_check_branch
      %95 = sbr.rel (0) target = $region33
    $region32: #{tpu_custom_call.1} parent=1 // pred_region
      %s97 = ssub.s32 512, 512
      %98 = vsyncadd [#allocation15], %s97
      %s99 = sshll.u32 [#allocation14], 4
      %s100 = int_to_ptr.vmem [resolvable:$true] %s99
      %105 = dma.hbm_to_vmem [thread:$0]  %s7, 512, %s100, [#allocation15], 128, 128, 8
    $region33: #{tpu_custom_call.1} parent=1 // pred_fallthru
      _
    // Predicated region
    $region34: #{tpu_custom_call.1} parent=1 // pred_check
      _
    $region35: #{tpu_custom_call.1} parent=1 // pred_check_branch
      %107 = sbr.rel (0) target = $region37
    $region36: #{tpu_custom_call.1} parent=1 // pred_region
      %s109 = ssub.s32 16, 16
      %110 = vsyncadd [#allocation15], %s109
      %s112 = sshll.u32 [#allocation16], 4
      %s113 = int_to_ptr.vmem [resolvable:$true] %s112
      %115 = dma.hbm_to_vmem [thread:$0]  %s8, 16, %s113, [#allocation15]
    $region37: #{tpu_custom_call.1} parent=1 // pred_fallthru
      _
    // Predicated region
    $region38: #{tpu_custom_call.1} parent=1 // pred_check
      _
    $region39: #{tpu_custom_call.1} parent=1 // pred_check_branch
      %117 = sbr.rel (0) target = $region41
    $region40: #{tpu_custom_call.1} parent=1 // pred_region
      %118 = dma.done [#allocation3], 128
    $region41: #{tpu_custom_call.1} parent=1 // pred_fallthru
      _
    // Predicated region
    $region42: #{tpu_custom_call.1} parent=1 // pred_check
      _
    $region43: #{tpu_custom_call.1} parent=1 // pred_check_branch
      %120 = sbr.rel (0) target = $region45
    $region44: #{tpu_custom_call.1} parent=1 // pred_region
      %121 = dma.done [#allocation6], 128
    $region45: #{tpu_custom_call.1} parent=1 // pred_fallthru
      _
    // Predicated region
    $region46: #{tpu_custom_call.1} parent=1 // pred_check
      _
    $region47: #{tpu_custom_call.1} parent=1 // pred_check_branch
      %123 = sbr.rel (0) target = $region49
    $region48: #{tpu_custom_call.1} parent=1 // pred_region
      %124 = dma.done [#allocation6], 16
    $region49: #{tpu_custom_call.1} parent=1 // pred_fallthru
      _
    // Predicated region
    $region50: #{tpu_custom_call.1} parent=1 // pred_check
      _
    $region51: #{tpu_custom_call.1} parent=1 // pred_check_branch
      %126 = sbr.rel (0) target = $region53
    $region52: #{tpu_custom_call.1} parent=1 // pred_region
      %127 = dma.done [#allocation9], 512
    $region53: #{tpu_custom_call.1} parent=1 // pred_fallthru
      _
    // Predicated region
    $region54: #{tpu_custom_call.1} parent=1 // pred_check
      _
    $region55: #{tpu_custom_call.1} parent=1 // pred_check_branch
      %129 = sbr.rel (0) target = $region57
    $region56: #{tpu_custom_call.1} parent=1 // pred_region
      %130 = dma.done [#allocation9], 16
    $region57: #{tpu_custom_call.1} parent=1 // pred_fallthru
      _
    // Predicated region
    $region58: #{tpu_custom_call.1} parent=1 // pred_check
      _
    $region59: #{tpu_custom_call.1} parent=1 // pred_check_branch
      %132 = sbr.rel (0) target = $region61
    $region60: #{tpu_custom_call.1} parent=1 // pred_region
      %133 = dma.done [#allocation12], 512
    $region61: #{tpu_custom_call.1} parent=1 // pred_fallthru
      _
    // Predicated region
    $region62: #{tpu_custom_call.1} parent=1 // pred_check
      _
    $region63: #{tpu_custom_call.1} parent=1 // pred_check_branch
      %135 = sbr.rel (0) target = $region65
    $region64: #{tpu_custom_call.1} parent=1 // pred_region
      %136 = dma.done [#allocation12], 16
    $region65: #{tpu_custom_call.1} parent=1 // pred_fallthru
      _
    // Predicated region
    $region66: #{tpu_custom_call.1} parent=1 // pred_check
      _
    $region67: #{tpu_custom_call.1} parent=1 // pred_check_branch
      %138 = sbr.rel (0) target = $region69
    $region68: #{tpu_custom_call.1} parent=1 // pred_region
      %139 = dma.done [#allocation15], 512
    $region69: #{tpu_custom_call.1} parent=1 // pred_fallthru
      _
    // Predicated region
    $region70: #{tpu_custom_call.1} parent=1 // pred_check
      _
    $region71: #{tpu_custom_call.1} parent=1 // pred_check_branch
      %141 = sbr.rel (0) target = $region73
    $region72: #{tpu_custom_call.1} parent=1 // pred_region
      %142 = dma.done [#allocation15], 16
    $region73: #{tpu_custom_call.1} parent=1 // pred_fallthru
      _
    %v143 = vld [vmem:[#allocation2] sm:$0xff]
    %v144 = vld [vmem:[#allocation5] sm:$0xff]
    %v145 = vld [vmem:[#allocation7] sm:$0x1]
    %v147 = vlaneseq
    %v148 = vshrl.u32 %v147, 7
    %v149 = vsub.s32 0, %v148
    %v150 = vrot.slane %v145, %v149
    %vm152 = vcmask 64512
    %v154 = vsel %vm152, %v143, 0
    %156 = vmatprep.subr.mxu0 0.0
    %157 = vmatpush1.msra.mxu0 %v144
    %158 = vmatprep.subr.mxu0 0.0
    %159 = vmatpush1.msra.mxu0 0.0
    %160 = vmatprep.subr.mxu0 0.0
    %161 = vmatpush1.msra.mxu0 0.0
    %162 = vmatprep.subr.mxu0 0.0
    %163 = vmatpush1.msra.mxu0 0.0
    %164 = vmatprep.subr.mxu0 0.0
    %165 = vmatpush1.msra.mxu0 0.0
    %166 = vmatprep.subr.mxu0 0.0
    %167 = vmatpush1.msra.mxu0 0.0
    %168 = vmatprep.subr.mxu0 0.0
    %169 = vmatpush1.msra.mxu0 0.0
    %170 = vmatprep.subr.mxu0 0.0
    %171 = vmatpush1.msra.mxu0 0.0
    %172 = vmatprep.subr.mxu0 0.0
    %173 = vmatpush1.msra.mxu0 0.0
    %174 = vmatprep.subr.mxu0 0.0
    %175 = vmatpush1.msra.mxu0 0.0
    %176 = vmatprep.subr.mxu0 0.0
    %177 = vmatpush1.msra.mxu0 0.0
    %178 = vmatprep.subr.mxu0 0.0
    %179 = vmatpush1.msra.mxu0 0.0
    %180 = vmatprep.subr.mxu0 0.0
    %181 = vmatpush1.msra.mxu0 0.0
    %182 = vmatprep.subr.mxu0 0.0
    %183 = vmatpush1.msra.mxu0 0.0
    %184 = vmatprep.subr.mxu0 0.0
    %185 = vmatpush1.msra.mxu0 0.0
    %186 = vmatprep.subr.mxu0 0.0
    %187 = vmatpush1.msra.mxu0 0.0
    %188 = vmatprep.subr.mxu0 0.0
    %189 = vmatpush1.msra.mxu0 0.0
    %190 = vmatprep.subr.mxu0 0.0
    %191 = vmatpush1.msra.mxu0 0.0
    %192 = vmatprep.subr.mxu0 0.0
    %193 = vmatpush1.msra.mxu0 0.0
    %194 = vmatprep.subr.mxu0 0.0
    %195 = vmatpush1.msra.mxu0 0.0
    %196 = vmatprep.subr.mxu0 0.0
    %197 = vmatpush1.msra.mxu0 0.0
    %198 = vmatprep.subr.mxu0 0.0
    %199 = vmatpush1.msra.mxu0 0.0
    %200 = vmatprep.subr.mxu0 0.0
    %201 = vmatpush1.msra.mxu0 0.0
    %202 = vmatprep.subr.mxu0 0.0
    %203 = vmatpush1.msra.mxu0 0.0
    %204 = vmatprep.subr.mxu0 0.0
    %205 = vmatpush1.msra.mxu0 0.0
    %206 = vmatprep.subr.mxu0 0.0
    %207 = vmatpush1.msra.mxu0 0.0
    %208 = vmatprep.subr.mxu0 0.0
    %209 = vmatpush1.msra.mxu0 0.0
    %210 = vmatprep.subr.mxu0 0.0
    %211 = vmatpush1.msra.mxu0 0.0
    %212 = vmatprep.subr.mxu0 0.0
    %213 = vmatpush1.msra.mxu0 0.0
    %214 = vmatprep.subr.mxu0 0.0
    %215 = vmatpush1.msra.mxu0 0.0
    %216 = vmatprep.subr.mxu0 0.0
    %217 = vmatpush1.msra.mxu0 0.0
    %218 = vmatprep.subr.mxu0 0.0
    %219 = vmatpush1.msra.mxu0 0.0
    %220 = vmatprep.mubr.f32.mxu0 0.0
    %221 = vmatmul.mubr.f32.gmra.mrb[0].mxu0 %v154
    %v222 = vpop.f32.mrb[0].mxu0
    %v223 = vadd.f32 %v150, %v222
    %v224 = vpop.f32.mrb[0].mxu0
    %225 = vdwg.mxu0
    %v226 = vmax.f32 %v223, 0.0
    %v227 = vld [vmem:[#allocation8] sm:$0xff]
    %v228 = vld [vmem:[#allocation8 + $0x8] sm:$0xff]
    %v229 = vld [vmem:[#allocation8 + $0x10] sm:$0xff]
    %v230 = vld [vmem:[#allocation8 + $0x18] sm:$0xff]
    %v231 = vld [vmem:[#allocation10] sm:$0x1]
    %v233 = vlaneseq
    %v234 = vshrl.u32 %v233, 7
    %v235 = vsub.s32 0, %v234
    %v236 = vrot.slane %v231, %v235
    %vm238 = vcmask 261120
    %v240 = vsel %vm238, %v226, 0
    %242 = vmatprep.subr.mxu0 0.0
    %243 = vmatpush1.msra.mxu0 %v227
    %244 = vmatprep.subr.mxu0 0.0
    %245 = vmatpush1.msra.mxu0 %v228
    %246 = vmatprep.subr.mxu0 0.0
    %247 = vmatpush1.msra.mxu0 %v229
    %248 = vmatprep.subr.mxu0 0.0
    %249 = vmatpush1.msra.mxu0 %v230
    %250 = vmatprep.subr.mxu0 0.0
    %251 = vmatpush1.msra.mxu0 0.0
    %252 = vmatprep.subr.mxu0 0.0
    %253 = vmatpush1.msra.mxu0 0.0
    %254 = vmatprep.subr.mxu0 0.0
    %255 = vmatpush1.msra.mxu0 0.0
    %256 = vmatprep.subr.mxu0 0.0
    %257 = vmatpush1.msra.mxu0 0.0
    %258 = vmatprep.subr.mxu0 0.0
    %259 = vmatpush1.msra.mxu0 0.0
    %260 = vmatprep.subr.mxu0 0.0
    %261 = vmatpush1.msra.mxu0 0.0
    %262 = vmatprep.subr.mxu0 0.0
    %263 = vmatpush1.msra.mxu0 0.0
    %264 = vmatprep.subr.mxu0 0.0
    %265 = vmatpush1.msra.mxu0 0.0
    %266 = vmatprep.subr.mxu0 0.0
    %267 = vmatpush1.msra.mxu0 0.0
    %268 = vmatprep.subr.mxu0 0.0
    %269 = vmatpush1.msra.mxu0 0.0
    %270 = vmatprep.subr.mxu0 0.0
    %271 = vmatpush1.msra.mxu0 0.0
    %272 = vmatprep.subr.mxu0 0.0
    %273 = vmatpush1.msra.mxu0 0.0
    %274 = vmatprep.subr.mxu0 0.0
    %275 = vmatpush1.msra.mxu0 0.0
    %276 = vmatprep.subr.mxu0 0.0
    %277 = vmatpush1.msra.mxu0 0.0
    %278 = vmatprep.subr.mxu0 0.0
    %279 = vmatpush1.msra.mxu0 0.0
    %280 = vmatprep.subr.mxu0 0.0
    %281 = vmatpush1.msra.mxu0 0.0
    %282 = vmatprep.subr.mxu0 0.0
    %283 = vmatpush1.msra.mxu0 0.0
    %284 = vmatprep.subr.mxu0 0.0
    %285 = vmatpush1.msra.mxu0 0.0
    %286 = vmatprep.subr.mxu0 0.0
    %287 = vmatpush1.msra.mxu0 0.0
    %288 = vmatprep.subr.mxu0 0.0
    %289 = vmatpush1.msra.mxu0 0.0
    %290 = vmatprep.subr.mxu0 0.0
    %291 = vmatpush1.msra.mxu0 0.0
    %292 = vmatprep.subr.mxu0 0.0
    %293 = vmatpush1.msra.mxu0 0.0
    %294 = vmatprep.subr.mxu0 0.0
    %295 = vmatpush1.msra.mxu0 0.0
    %296 = vmatprep.subr.mxu0 0.0
    %297 = vmatpush1.msra.mxu0 0.0
    %298 = vmatprep.subr.mxu0 0.0
    %299 = vmatpush1.msra.mxu0 0.0
    %300 = vmatprep.subr.mxu0 0.0
    %301 = vmatpush1.msra.mxu0 0.0
    %302 = vmatprep.subr.mxu0 0.0
    %303 = vmatpush1.msra.mxu0 0.0
    %304 = vmatprep.subr.mxu0 0.0
    %305 = vmatpush1.msra.mxu0 0.0
    %306 = vmatprep.mubr.f32.mxu0 0.0
    %307 = vmatmul.mubr.f32.gmra.mrb[0].mxu0 %v240
    %v308 = vpop.f32.mrb[0].mxu0
    %v309 = vadd.f32 %v236, %v308
    %v310 = vpop.f32.mrb[0].mxu0
    %311 = vdwg.mxu0
    %v312 = vmax.f32 %v309, 0.0
    %v313 = vld [vmem:[#allocation11] sm:$0xff]
    %v314 = vld [vmem:[#allocation11 + $0x8] sm:$0xff]
    %v315 = vld [vmem:[#allocation11 + $0x10] sm:$0xff]
    %v316 = vld [vmem:[#allocation11 + $0x18] sm:$0xff]
    %v317 = vld [vmem:[#allocation13] sm:$0x1]
    %v319 = vlaneseq
    %v320 = vshrl.u32 %v319, 7
    %v321 = vsub.s32 0, %v320
    %v322 = vrot.slane %v317, %v321
    %v325 = vsel %vm238, %v312, 0
    %327 = vmatprep.subr.mxu0 0.0
    %328 = vmatpush1.msra.mxu0 %v313
    %329 = vmatprep.subr.mxu0 0.0
    %330 = vmatpush1.msra.mxu0 %v314
    %331 = vmatprep.subr.mxu0 0.0
    %332 = vmatpush1.msra.mxu0 %v315
    %333 = vmatprep.subr.mxu0 0.0
    %334 = vmatpush1.msra.mxu0 %v316
    %335 = vmatprep.subr.mxu0 0.0
    %336 = vmatpush1.msra.mxu0 0.0
    %337 = vmatprep.subr.mxu0 0.0
    %338 = vmatpush1.msra.mxu0 0.0
    %339 = vmatprep.subr.mxu0 0.0
    %340 = vmatpush1.msra.mxu0 0.0
    %341 = vmatprep.subr.mxu0 0.0
    %342 = vmatpush1.msra.mxu0 0.0
    %343 = vmatprep.subr.mxu0 0.0
    %344 = vmatpush1.msra.mxu0 0.0
    %345 = vmatprep.subr.mxu0 0.0
    %346 = vmatpush1.msra.mxu0 0.0
    %347 = vmatprep.subr.mxu0 0.0
    %348 = vmatpush1.msra.mxu0 0.0
    %349 = vmatprep.subr.mxu0 0.0
    %350 = vmatpush1.msra.mxu0 0.0
    %351 = vmatprep.subr.mxu0 0.0
    %352 = vmatpush1.msra.mxu0 0.0
    %353 = vmatprep.subr.mxu0 0.0
    %354 = vmatpush1.msra.mxu0 0.0
    %355 = vmatprep.subr.mxu0 0.0
    %356 = vmatpush1.msra.mxu0 0.0
    %357 = vmatprep.subr.mxu0 0.0
    %358 = vmatpush1.msra.mxu0 0.0
    %359 = vmatprep.subr.mxu0 0.0
    %360 = vmatpush1.msra.mxu0 0.0
    %361 = vmatprep.subr.mxu0 0.0
    %362 = vmatpush1.msra.mxu0 0.0
    %363 = vmatprep.subr.mxu0 0.0
    %364 = vmatpush1.msra.mxu0 0.0
    %365 = vmatprep.subr.mxu0 0.0
    %366 = vmatpush1.msra.mxu0 0.0
    %367 = vmatprep.subr.mxu0 0.0
    %368 = vmatpush1.msra.mxu0 0.0
    %369 = vmatprep.subr.mxu0 0.0
    %370 = vmatpush1.msra.mxu0 0.0
    %371 = vmatprep.subr.mxu0 0.0
    %372 = vmatpush1.msra.mxu0 0.0
    %373 = vmatprep.subr.mxu0 0.0
    %374 = vmatpush1.msra.mxu0 0.0
    %375 = vmatprep.subr.mxu0 0.0
    %376 = vmatpush1.msra.mxu0 0.0
    %377 = vmatprep.subr.mxu0 0.0
    %378 = vmatpush1.msra.mxu0 0.0
    %379 = vmatprep.subr.mxu0 0.0
    %380 = vmatpush1.msra.mxu0 0.0
    %381 = vmatprep.subr.mxu0 0.0
    %382 = vmatpush1.msra.mxu0 0.0
    %383 = vmatprep.subr.mxu0 0.0
    %384 = vmatpush1.msra.mxu0 0.0
    %385 = vmatprep.subr.mxu0 0.0
    %386 = vmatpush1.msra.mxu0 0.0
    %387 = vmatprep.subr.mxu0 0.0
    %388 = vmatpush1.msra.mxu0 0.0
    %389 = vmatprep.subr.mxu0 0.0
    %390 = vmatpush1.msra.mxu0 0.0
    %391 = vmatprep.mubr.f32.mxu0 0.0
    %392 = vmatmul.mubr.f32.gmra.mrb[0].mxu0 %v325
    %v393 = vpop.f32.mrb[0].mxu0
    %v394 = vadd.f32 %v322, %v393
    %v395 = vpop.f32.mrb[0].mxu0
    %396 = vdwg.mxu0
    %v397 = vmax.f32 %v394, 0.0
    %v398 = vld [vmem:[#allocation14] sm:$0xff]
    %v399 = vld [vmem:[#allocation14 + $0x8] sm:$0xff]
    %v400 = vld [vmem:[#allocation14 + $0x10] sm:$0xff]
    %v401 = vld [vmem:[#allocation14 + $0x18] sm:$0xff]
    %v402 = vld [vmem:[#allocation16] sm:$0x1]
    %v404 = vlaneseq
    %v405 = vshrl.u32 %v404, 7
    %v406 = vsub.s32 0, %v405
    %v407 = vrot.slane %v402, %v406
    %v410 = vsel %vm238, %v397, 0
    %412 = vmatprep.subr.mxu0 0.0
    %413 = vmatpush1.msra.mxu0 %v398
    %414 = vmatprep.subr.mxu0 0.0
    %415 = vmatpush1.msra.mxu0 %v399
    %416 = vmatprep.subr.mxu0 0.0
    %417 = vmatpush1.msra.mxu0 %v400
    %418 = vmatprep.subr.mxu0 0.0
    %419 = vmatpush1.msra.mxu0 %v401
    %420 = vmatprep.subr.mxu0 0.0
    %421 = vmatpush1.msra.mxu0 0.0
    %422 = vmatprep.subr.mxu0 0.0
    %423 = vmatpush1.msra.mxu0 0.0
    %424 = vmatprep.subr.mxu0 0.0
    %425 = vmatpush1.msra.mxu0 0.0
    %426 = vmatprep.subr.mxu0 0.0
    %427 = vmatpush1.msra.mxu0 0.0
    %428 = vmatprep.subr.mxu0 0.0
    %429 = vmatpush1.msra.mxu0 0.0
    %430 = vmatprep.subr.mxu0 0.0
    %431 = vmatpush1.msra.mxu0 0.0
    %432 = vmatprep.subr.mxu0 0.0
    %433 = vmatpush1.msra.mxu0 0.0
    %434 = vmatprep.subr.mxu0 0.0
    %435 = vmatpush1.msra.mxu0 0.0
    %436 = vmatprep.subr.mxu0 0.0
    %437 = vmatpush1.msra.mxu0 0.0
    %438 = vmatprep.subr.mxu0 0.0
    %439 = vmatpush1.msra.mxu0 0.0
    %440 = vmatprep.subr.mxu0 0.0
    %441 = vmatpush1.msra.mxu0 0.0
    %442 = vmatprep.subr.mxu0 0.0
    %443 = vmatpush1.msra.mxu0 0.0
    %444 = vmatprep.subr.mxu0 0.0
    %445 = vmatpush1.msra.mxu0 0.0
    %446 = vmatprep.subr.mxu0 0.0
    %447 = vmatpush1.msra.mxu0 0.0
    %448 = vmatprep.subr.mxu0 0.0
    %449 = vmatpush1.msra.mxu0 0.0
    %450 = vmatprep.subr.mxu0 0.0
    %451 = vmatpush1.msra.mxu0 0.0
    %452 = vmatprep.subr.mxu0 0.0
    %453 = vmatpush1.msra.mxu0 0.0
    %454 = vmatprep.subr.mxu0 0.0
    %455 = vmatpush1.msra.mxu0 0.0
    %456 = vmatprep.subr.mxu0 0.0
    %457 = vmatpush1.msra.mxu0 0.0
    %458 = vmatprep.subr.mxu0 0.0
    %459 = vmatpush1.msra.mxu0 0.0
    %460 = vmatprep.subr.mxu0 0.0
    %461 = vmatpush1.msra.mxu0 0.0
    %462 = vmatprep.subr.mxu0 0.0
    %463 = vmatpush1.msra.mxu0 0.0
    %464 = vmatprep.subr.mxu0 0.0
    %465 = vmatpush1.msra.mxu0 0.0
    %466 = vmatprep.subr.mxu0 0.0
    %467 = vmatpush1.msra.mxu0 0.0
    %468 = vmatprep.subr.mxu0 0.0
    %469 = vmatpush1.msra.mxu0 0.0
    %470 = vmatprep.subr.mxu0 0.0
    %471 = vmatpush1.msra.mxu0 0.0
    %472 = vmatprep.subr.mxu0 0.0
    %473 = vmatpush1.msra.mxu0 0.0
    %474 = vmatprep.subr.mxu0 0.0
    %475 = vmatpush1.msra.mxu0 0.0
    %476 = vmatprep.mubr.f32.mxu0 0.0
    %477 = vmatmul.mubr.f32.gmra.mrb[0].mxu0 %v410
    %v478 = vpop.f32.mrb[0].mxu0
    %v479 = vadd.f32 %v407, %v478
    %v480 = vpop.f32.mrb[0].mxu0
    %481 = vdwg.mxu0
    %482 = vst [vmem:[#allocation17] sm:$0xff] %v479
    // Predicated region
    $region74: #{tpu_custom_call.1} parent=1 // pred_check
      _
    $region75: #{tpu_custom_call.1} parent=1 // pred_check_branch
      %484 = sbr.rel (0) target = $region77
    $region76: #{tpu_custom_call.1} parent=1 // pred_region
      %s486 = ssub.s32 128, 128
      %487 = vsyncadd [#allocation4], %s486
      %s489 = sshll.u32 [#allocation17], 4
      %s490 = int_to_ptr.vmem [resolvable:$true] %s489
      %492 = dma.vmem_to_hbm [thread:$0]  %s490, 128, %s9, [#allocation4]
    $region77: #{tpu_custom_call.1} parent=1 // pred_fallthru
      _
    // Predicated region
    $region78: #{tpu_custom_call.1} parent=1 // pred_check
      _
    $region79: #{tpu_custom_call.1} parent=1 // pred_check_branch
      %494 = sbr.rel (0) target = $region81
    $region80: #{tpu_custom_call.1} parent=1 // pred_region
      %495 = dma.done [#allocation4], 128
    $region81: #{tpu_custom_call.1} parent=1 // pred_fallthru
      _
    %496 = vsyncpa [#allocation3], 1
    %497 = vsyncpa [#allocation6], 1
    %498 = vsyncpa [#allocation9], 1
    %499 = vsyncpa [#allocation12], 1
    %500 = vsyncpa [#allocation15], 1
    %501 = vsyncpa [#allocation4], 1

</llo_original>
